<compile_context>
chip_gen: v5e
topology: v5e:2x2
jax: 0.10.0
libtpu: 0.0.40
codegen_flags: <defaults>
</compile_context>

<pallas_src>
import functools
import math

import jax
import jax.numpy as jnp
from jax.experimental import pallas as pl
from jax.experimental.pallas import tpu as pltpu


# ----------------------------------- kernel -----------------------------------

def _nam_kernel(x_ref, wmu1_ref, wmu2_ref, vec_ref, out_ref, *, h_tau0):
    """Transposed layout: batch in the lane dimension.

    x_ref   : (D_in, tb)          input tile (D_in == n_blocks)
    wmu1_ref: (H0, D_in)          features_mu Linear 1 weight
    wmu2_ref: (H1, H0)            features_mu Linear 2 weight
    vec_ref : (R, 8)              packed column-vector params:
              col 0: bmu1[:H0]    col 1: bmu2[:H1]   col 2: wmu3[:H1]
              col 3: wt1[:n*H_t0] col 4: bt1[:n*H_t0] col 5: wcomb[:n*H_t0]
              col 6: row0 = bmu3, row1 = bcomb (folded tau2+lr bias)
    out_ref : (2, tb)             row 0 = mu, row 1 = lr
    """
    x = x_ref[...]                                   # (n_blocks, tb)
    n_blocks = x.shape[0]
    H0 = wmu1_ref.shape[0]
    H1 = wmu2_ref.shape[0]
    nH = n_blocks * h_tau0

    bmu1 = vec_ref[0:H0, 0:1]                        # (H0, 1)
    bmu2 = vec_ref[0:H1, 1:2]                        # (H1, 1)
    wmu3 = vec_ref[0:H1, 2:3]                        # (H1, 1)
    wt1 = vec_ref[0:nH, 3:4]                         # (nH, 1)
    bt1 = vec_ref[0:nH, 4:5]                         # (nH, 1)
    wcmb = vec_ref[0:nH, 5:6]                        # (nH, 1)
    bmu3 = vec_ref[0:1, 6:7]                         # (1, 1)
    bcmb = vec_ref[1:2, 6:7]                         # (1, 1)

    # ---------------- mu path: Linear -> ReLU -> Linear -> ReLU -> Linear -----
    h = jnp.dot(wmu1_ref[...], x, preferred_element_type=jnp.float32) + bmu1
    h = jnp.maximum(h, 0.0)
    h = jnp.dot(wmu2_ref[...], h, preferred_element_type=jnp.float32) + bmu2
    h = jnp.maximum(h, 0.0)
    # last Linear has out_features = 1 -> VPU multiply + sublane reduce (no MXU)
    mu = jnp.sum(h * wmu3, axis=0, keepdims=True) + bmu3          # (1, tb)

    # ---------------- tau path -------------------------------------------------
    # BlockLinear(n_blocks, in=1, out=H_t0): each input row feeds H_t0 units, so
    # it is a broadcast-multiply, not a matmul on a block-diagonal matrix.
    # Row ordering of the replicated input is r = k*n_blocks + j (copy k, block j);
    # wt1 / bt1 / wcmb are packed in the same ordering.
    xr = jnp.concatenate([x] * h_tau0, axis=0)                    # (nH, tb)
    t = xr * wt1 + bt1
    # numerically-stable softplus
    t = jnp.maximum(t, 0.0) + jnp.log1p(jnp.exp(-jnp.abs(t)))
    # second BlockLinear (out=1 per block) with the lr head folded in:
    # lr = sum_{j,k} softplus(.)_{j,k} * (wt2[j,k] * wlr[j]) + (sum_j bt2[j]*wlr[j] + blr)
    lr = jnp.sum(t * wcmb, axis=0, keepdims=True) + bcmb          # (1, tb)

    out_ref[...] = jnp.concatenate([mu, lr], axis=0)              # (2, tb)


# ----------------------------------- wrapper -----------------------------------

def r_mix_nam_dnn(x, kparams, *, tb=512):
    """x: (B, D_in) float32.  kparams: dict from pack_params().  Returns (mu, lr), each (B, 1)."""
    B, D_in = x.shape
    wmu1, wmu2, vecs = kparams["wmu1"], kparams["wmu2"], kparams["vecs"]
    h_tau0 = kparams["h_tau0"]

    # Batch tile: multiple of 128 (lane width), capped at what B needs.
    tb = max(128, (tb // 128) * 128)
    tb_eff = min(tb, pl.cdiv(B, 128) * 128)
    B_pad = pl.cdiv(B, tb_eff) * tb_eff
    grid = (B_pad // tb_eff,)

    # Glue: pad + transpose so batch lands in the lane dimension.
    xt = jnp.zeros((D_in, B_pad), jnp.float32).at[:, :B].set(x.astype(jnp.float32).T)

    # VMEM footprint per step (even at tb=4096) is a few MiB -> no generation-
    # specific retiling needed (v5e/v6e 128 MiB, v7x 64 MiB).
    out = pl.pallas_call(
        functools.partial(_nam_kernel, h_tau0=h_tau0),
        grid=grid,
        in_specs=[
            pl.BlockSpec((D_in, tb_eff), lambda i: (0, i)),
            pl.BlockSpec(wmu1.shape, lambda i: (0, 0)),   # constant index_map:
            pl.BlockSpec(wmu2.shape, lambda i: (0, 0)),   # fetched once, no re-DMA
            pl.BlockSpec(vecs.shape, lambda i: (0, 0)),
        ],
        out_specs=pl.BlockSpec((2, tb_eff), lambda i: (0, i)),
        out_shape=jax.ShapeDtypeStruct((2, B_pad), jnp.float32),
        compiler_params=pltpu.CompilerParams(dimension_semantics=("parallel",)),
    )(xt, wmu1, wmu2, vecs)

    mu = out[0, :B][:, None]
    lr = out[1, :B][:, None]
    return mu, lr


# ----------------------- parameter construction (glue) -----------------------

def _kaiming_uniform(key, out_f, in_f):
    bound = math.sqrt(6.0 / in_f)          # torch kaiming_uniform_ (a=0)
    return jax.random.uniform(key, (out_f, in_f), jnp.float32, -bound, bound)


def _bias_uniform(key, out_f, in_f):
    bound = 1.0 / math.sqrt(in_f)
    return jax.random.uniform(key, (out_f,), jnp.float32, -bound, bound)


def init_torch_style_params(key, D_in, n_blocks, H_mu, H_tau, D_out):
    """PyTorch-orientation parameters of R_mix_NAM_DNN."""
    assert D_in == n_blocks, "BlockLinear(in_features=1) requires D_in == n_blocks"
    assert D_out == 1, "self.lr(tau_Y) requires D_out == 1"
    H0, H1 = H_mu
    H_t0 = H_tau[0]
    ks = jax.random.split(key, 12)
    p = {
        "mu1_w": _kaiming_uniform(ks[0], H0, D_in),
        "mu1_b": _bias_uniform(ks[1], H0, D_in),
        "mu2_w": _kaiming_uniform(ks[2], H1, H0),
        "mu2_b": _bias_uniform(ks[3], H1, H0),
        "mu3_w": _kaiming_uniform(ks[4], D_out, H1),
        "mu3_b": _bias_uniform(ks[5], D_out, H1),
        "t1_w": jnp.stack([_kaiming_uniform(jax.random.fold_in(ks[6], j), H_t0, 1)
                           for j in range(n_blocks)]),                    # (n, H_t0, 1)
        "t1_b": jnp.stack([_bias_uniform(jax.random.fold_in(ks[7], j), H_t0, 1)
                           for j in range(n_blocks)]),                    # (n, H_t0)
        "t2_w": jnp.stack([_kaiming_uniform(jax.random.fold_in(ks[8], j), D_out, H_t0)
                           for j in range(n_blocks)]),                    # (n, 1, H_t0)
        "t2_b": jnp.stack([_bias_uniform(jax.random.fold_in(ks[9], j), D_out, H_t0)
                           for j in range(n_blocks)]),                    # (n, 1)
        "lr_w": _kaiming_uniform(ks[10], D_out, n_blocks),                # (1, n)
        "lr_b": _bias_uniform(ks[11], D_out, n_blocks),                   # (1,)
    }
    return p


def pack_params(p, h_tau0):
    """Pack PyTorch-style params into the 3 kernel slabs (lr head folded into tau2)."""
    H0 = p["mu1_w"].shape[0]
    H1 = p["mu2_w"].shape[0]
    n = p["t1_w"].shape[0]
    nH = n * h_tau0
    R = max(H0, H1, nH, 8)

    vecs = jnp.zeros((R, 8), jnp.float32)
    vecs = vecs.at[:H0, 0].set(p["mu1_b"])
    vecs = vecs.at[:H1, 1].set(p["mu2_b"])
    vecs = vecs.at[:H1, 2].set(p["mu3_w"][0])
    # tau row ordering r = k*n + j  (matches jnp.concatenate([x]*h_tau0, axis=0))
    wt1 = p["t1_w"][:, :, 0].T.reshape(-1)                                 # (nH,)
    bt1 = p["t1_b"].T.reshape(-1)                                          # (nH,)
    # fold lr head: per (j,k) weight = wt2[j,0,k] * wlr[0,j]
    wcmb = (p["t2_w"][:, 0, :] * p["lr_w"][0][:, None]).T.reshape(-1)      # (nH,)
    bcmb = jnp.sum(p["t2_b"][:, 0] * p["lr_w"][0]) + p["lr_b"][0]
    vecs = vecs.at[:nH, 3].set(wt1)
    vecs = vecs.at[:nH, 4].set(bt1)
    vecs = vecs.at[:nH, 5].set(wcmb)
    vecs = vecs.at[0, 6].set(p["mu3_b"][0])
    vecs = vecs.at[1, 6].set(bcmb)

    return {"wmu1": p["mu1_w"], "wmu2": p["mu2_w"], "vecs": vecs, "h_tau0": h_tau0}


# ----------------------------------- reference -----------------------------------

def reference(x, p):
    """Pure-JAX replica of the PyTorch forward (dropout = identity in eval)."""
    h = jnp.maximum(x @ p["mu1_w"].T + p["mu1_b"], 0.0)
    h = jnp.maximum(h @ p["mu2_w"].T + p["mu2_b"], 0.0)
    mu = h @ p["mu3_w"].T + p["mu3_b"]

    n, H_t0 = p["t1_b"].shape
    t = jnp.concatenate(
        [x[:, j:j + 1] @ p["t1_w"][j].T + p["t1_b"][j] for j in range(n)], axis=1)
    t = jax.nn.softplus(t)
    tau_y = jnp.concatenate(
        [t[:, j * H_t0:(j + 1) * H_t0] @ p["t2_w"][j].T + p["t2_b"][j] for j in range(n)],
        axis=1)
    lr = tau_y @ p["lr_w"].T + p["lr_b"]
    return mu, lr


if __name__ == "__main__":
    # Small shapes consistent with the module's forward constraints.
    B, n_blocks, D_out = 16, 8, 1
    D_in = n_blocks
    H_mu, H_tau = (32, 16), (4,)

    key = jax.random.PRNGKey(0)
    kx, kp = jax.random.split(key)
    x = jax.random.normal(kx, (B, D_in), jnp.float32)

    torch_p = init_torch_style_params(kp, D_in, n_blocks, H_mu, H_tau, D_out)
    kparams = pack_params(torch_p, H_tau[0])

    mu, lr_out = r_mix_nam_dnn(x, kparams, tb=512)
    jax.block_until_ready((mu, lr_out))

    mu_ref, lr_ref = reference(x, torch_p)
    assert mu.shape == (B, D_out) and lr_out.shape == (B, D_out)
    assert jnp.allclose(mu, mu_ref, atol=1e-5, rtol=1e-5)
    assert jnp.allclose(lr_out, lr_ref, atol=1e-5, rtol=1e-5)

    print("KERNEL_OK")
</pallas_src>

<mosaic_0001>
module attributes {stable_mosaic.version = 11 : i64} {
  func.func @_nam_kernel(%arg0: i32, %arg1: memref<8x128xf32, #tpu.memory_space<vmem>>, %arg2: memref<32x8xf32, #tpu.memory_space<vmem>>, %arg3: memref<16x32xf32, #tpu.memory_space<vmem>>, %arg4: memref<32x8xf32, #tpu.memory_space<vmem>>, %arg5: memref<2x128xf32, #tpu.memory_space<vmem>>) attributes {dimension_semantics = [#tpu.dimension_semantics<parallel>], iteration_bounds = array<i64: 1>, scalar_prefetch = 0 : i64, scratch_operands = 0 : i64, tpu.core_type = #tpu.core_type<tc>, window_params = [{transform_indices = @transform_0, window_bounds = array<i64: 8, 128>}, {pipeline_mode = #tpu.pipeline_mode<synchronous>, transform_indices = @transform_1, window_bounds = array<i64: 32, 8>}, {pipeline_mode = #tpu.pipeline_mode<synchronous>, transform_indices = @transform_2, window_bounds = array<i64: 16, 32>}, {pipeline_mode = #tpu.pipeline_mode<synchronous>, transform_indices = @transform_3, window_bounds = array<i64: 32, 8>}, {transform_indices = @transform_4, window_bounds = array<i64: 2, 128>}]} {
    %c0 = arith.constant 0 : index
    %c0_0 = arith.constant 0 : index
    %0 = vector.load %arg1[%c0, %c0_0] : memref<8x128xf32, #tpu.memory_space<vmem>>, vector<8x128xf32>
    %c0_1 = arith.constant 0 : index
    %c0_2 = arith.constant 0 : index
    %1 = vector.load %arg4[%c0_1, %c0_2] : memref<32x8xf32, #tpu.memory_space<vmem>>, vector<32x1xf32>
    %c0_3 = arith.constant 0 : index
    %c1 = arith.constant 1 : index
    %2 = vector.load %arg4[%c0_3, %c1] : memref<32x8xf32, #tpu.memory_space<vmem>>, vector<16x1xf32>
    %c0_4 = arith.constant 0 : index
    %c2 = arith.constant 2 : index
    %3 = vector.load %arg4[%c0_4, %c2] : memref<32x8xf32, #tpu.memory_space<vmem>>, vector<16x1xf32>
    %c0_5 = arith.constant 0 : index
    %c3 = arith.constant 3 : index
    %4 = vector.load %arg4[%c0_5, %c3] : memref<32x8xf32, #tpu.memory_space<vmem>>, vector<32x1xf32>
    %c0_6 = arith.constant 0 : index
    %c4 = arith.constant 4 : index
    %5 = vector.load %arg4[%c0_6, %c4] : memref<32x8xf32, #tpu.memory_space<vmem>>, vector<32x1xf32>
    %c0_7 = arith.constant 0 : index
    %c5 = arith.constant 5 : index
    %6 = vector.load %arg4[%c0_7, %c5] : memref<32x8xf32, #tpu.memory_space<vmem>>, vector<32x1xf32>
    %c0_8 = arith.constant 0 : index
    %c6 = arith.constant 6 : index
    %7 = vector.load %arg4[%c0_8, %c6] : memref<32x8xf32, #tpu.memory_space<vmem>>, vector<1x1xf32>
    %c1_9 = arith.constant 1 : index
    %c6_10 = arith.constant 6 : index
    %8 = vector.load %arg4[%c1_9, %c6_10] : memref<32x8xf32, #tpu.memory_space<vmem>>, vector<1x1xf32>
    %c0_11 = arith.constant 0 : index
    %c0_12 = arith.constant 0 : index
    %9 = vector.load %arg2[%c0_11, %c0_12] : memref<32x8xf32, #tpu.memory_space<vmem>>, vector<32x8xf32>
    %cst = arith.constant dense<0.000000e+00> : vector<32x128xf32>
    %10 = tpu.matmul %9, %0, %cst {dimension_numbers = #tpu.dot_dimension_numbers<[1], [0], [0], [1], [0, 0, 1, 1], [], []>} : vector<32x8xf32>, vector<8x128xf32>, vector<32x128xf32> -> vector<32x128xf32>
    %11 = vector.broadcast %1 : vector<32x1xf32> to vector<32x128xf32>
    %12 = arith.addf %10, %11 : vector<32x128xf32>
    %cst_13 = arith.constant 0.000000e+00 : f32
    %13 = vector.broadcast %cst_13 : f32 to vector<32x128xf32>
    %14 = arith.maximumf %12, %13 : vector<32x128xf32>
    %c0_14 = arith.constant 0 : index
    %c0_15 = arith.constant 0 : index
    %15 = vector.load %arg3[%c0_14, %c0_15] : memref<16x32xf32, #tpu.memory_space<vmem>>, vector<16x32xf32>
    %cst_16 = arith.constant dense<0.000000e+00> : vector<16x128xf32>
    %16 = tpu.matmul %15, %14, %cst_16 {dimension_numbers = #tpu.dot_dimension_numbers<[1], [0], [0], [1], [0, 0, 1, 1], [], []>} : vector<16x32xf32>, vector<32x128xf32>, vector<16x128xf32> -> vector<16x128xf32>
    %17 = vector.broadcast %2 : vector<16x1xf32> to vector<16x128xf32>
    %18 = arith.addf %16, %17 : vector<16x128xf32>
    %cst_17 = arith.constant 0.000000e+00 : f32
    %19 = vector.broadcast %cst_17 : f32 to vector<16x128xf32>
    %20 = arith.maximumf %18, %19 : vector<16x128xf32>
    %21 = vector.broadcast %3 : vector<16x1xf32> to vector<16x128xf32>
    %22 = arith.mulf %20, %21 : vector<16x128xf32>
    %cst_18 = arith.constant dense<0.000000e+00> : vector<128xf32>
    %23 = vector.multi_reduction <add>, %22, %cst_18 [0] : vector<16x128xf32> to vector<128xf32>
    %24 = vector.shape_cast %23 : vector<128xf32> to vector<1x128xf32>
    %25 = vector.broadcast %7 : vector<1x1xf32> to vector<1x128xf32>
    %26 = arith.addf %24, %25 : vector<1x128xf32>
    %27 = tpu.concatenate %0, %0, %0, %0 in 0 : vector<8x128xf32>, vector<8x128xf32>, vector<8x128xf32>, vector<8x128xf32> -> vector<32x128xf32>
    %28 = vector.broadcast %4 : vector<32x1xf32> to vector<32x128xf32>
    %29 = arith.mulf %27, %28 : vector<32x128xf32>
    %30 = vector.broadcast %5 : vector<32x1xf32> to vector<32x128xf32>
    %31 = arith.addf %29, %30 : vector<32x128xf32>
    %cst_19 = arith.constant 0.000000e+00 : f32
    %32 = vector.broadcast %cst_19 : f32 to vector<32x128xf32>
    %33 = arith.maximumf %31, %32 : vector<32x128xf32>
    %34 = math.absf %31 : vector<32x128xf32>
    %cst_20 = arith.constant 0.000000e+00 : f32
    %35 = vector.broadcast %cst_20 : f32 to vector<32x128xf32>
    %36 = arith.subf %35, %34 : vector<32x128xf32>
    %37 = math.exp %36 : vector<32x128xf32>
    %38 = math.log1p %37 : vector<32x128xf32>
    %39 = arith.addf %33, %38 : vector<32x128xf32>
    %40 = vector.broadcast %6 : vector<32x1xf32> to vector<32x128xf32>
    %41 = arith.mulf %39, %40 : vector<32x128xf32>
    %cst_21 = arith.constant dense<0.000000e+00> : vector<128xf32>
    %42 = vector.multi_reduction <add>, %41, %cst_21 [0] : vector<32x128xf32> to vector<128xf32>
    %43 = vector.shape_cast %42 : vector<128xf32> to vector<1x128xf32>
    %44 = vector.broadcast %8 : vector<1x1xf32> to vector<1x128xf32>
    %45 = arith.addf %43, %44 : vector<1x128xf32>
    %46 = tpu.concatenate %26, %45 in 0 : vector<1x128xf32>, vector<1x128xf32> -> vector<2x128xf32>
    %c0_22 = arith.constant 0 : index
    %c0_23 = arith.constant 0 : index
    %47 = vector.load %arg5[%c0_22, %c0_23] : memref<2x128xf32, #tpu.memory_space<vmem>>, vector<2x128xf32>
    tpu.vector_store %arg5[%c0_22, %c0_23], %46 {strides = array<i32>} : memref<2x128xf32, #tpu.memory_space<vmem>>, vector<2x128xf32>,
    return
  }
  func.func @transform_0(%arg0: i32) -> (i32, i32) {
    %c0_i32 = arith.constant 0 : i32
    %c0_i32_0 = arith.constant 0 : i32
    return %c0_i32, %arg0 : i32, i32
  }
  func.func @transform_1(%arg0: i32) -> (i32, i32) {
    %c0_i32 = arith.constant 0 : i32
    %c0_i32_0 = arith.constant 0 : i32
    %c0_i32_1 = arith.constant 0 : i32
    return %c0_i32, %c0_i32_0 : i32, i32
  }
  func.func @transform_2(%arg0: i32) -> (i32, i32) {
    %c0_i32 = arith.constant 0 : i32
    %c0_i32_0 = arith.constant 0 : i32
    %c0_i32_1 = arith.constant 0 : i32
    return %c0_i32, %c0_i32_0 : i32, i32
  }
  func.func @transform_3(%arg0: i32) -> (i32, i32) {
    %c0_i32 = arith.constant 0 : i32
    %c0_i32_0 = arith.constant 0 : i32
    %c0_i32_1 = arith.constant 0 : i32
    return %c0_i32, %c0_i32_0 : i32, i32
  }
  func.func @transform_4(%arg0: i32) -> (i32, i32) {
    %c0_i32 = arith.constant 0 : i32
    %c0_i32_0 = arith.constant 0 : i32
    return %c0_i32, %arg0 : i32, i32
  }
}

</mosaic_0001>

<llo_original>
// kernel: tpu_custom_call.1
$region0: #{tpu_custom_call.1}
  #allocation0 [shape = 'u32[]', space=smem, size = 0x4, offset = 0x4, fixed_abs, tag = 'smem constant byte address 0x4 - core index']
  #allocation1 [shape = 'u32[72,128]{1,0:T(1,128)}', space=vmem, size = 0x9000, scoped, tag = 'internal scratch']
  %s0 = inlined_call_operand.vmem [shape: f32[8,128], index: 0, kind: input, shape index: {}]
  %s1 = inlined_call_operand.vmem [shape: f32[32,8], index: 1, kind: input, shape index: {}]
  %s2 = inlined_call_operand.vmem [shape: f32[16,32], index: 2, kind: input, shape index: {}]
  %s3 = inlined_call_operand.vmem [shape: f32[32,8], index: 3, kind: input, shape index: {}]
  %s4 = inlined_call_operand.hbm [shape: f32[2,128], index: 4, kind: output, shape index: {}]
  %s5 = sld [smem:[#allocation0]]
  $region26: #{tpu_custom_call.1} parent=0
    _
  %s7 = ssub.s32 1, %s5
  %s8 = scalar_select 0, %s7, %s5
  $region1: #{tpu_custom_call.1} parent=0
    #allocation2 [shape = 'u8[1024]{0}', space=vmem, size = 0x400, scoped, tag = 'output window, operand 0, single buffered']
    #allocation3 [shape = 's32[1]{0}', space=sflag, size = 0x4, scoped, tag = 'scoped memory for tpu_custom_call.1']
    %9 = vsyncpa [#allocation3], 0
    // Predicated region
    $region2: #{tpu_custom_call.1} parent=1 // pred_check
      _
    $region3: #{tpu_custom_call.1} parent=1 // pred_check_branch
      %11 = sbr.rel (0) target = $region5
    $region4: #{tpu_custom_call.1} parent=1 // pred_region
      _
    $region5: #{tpu_custom_call.1} parent=1 // pred_fallthru
      _
    // Predicated region
    $region6: #{tpu_custom_call.1} parent=1 // pred_check
      _
    $region7: #{tpu_custom_call.1} parent=1 // pred_check_branch
      %13 = sbr.rel (0) target = $region9
    $region8: #{tpu_custom_call.1} parent=1 // pred_region
      _
    $region9: #{tpu_custom_call.1} parent=1 // pred_fallthru
      _
    // Predicated region
    $region10: #{tpu_custom_call.1} parent=1 // pred_check
      _
    $region11: #{tpu_custom_call.1} parent=1 // pred_check_branch
      %15 = sbr.rel (0) target = $region13
    $region12: #{tpu_custom_call.1} parent=1 // pred_region
      _
    $region13: #{tpu_custom_call.1} parent=1 // pred_fallthru
      _
    // Predicated region
    $region14: #{tpu_custom_call.1} parent=1 // pred_check
      _
    $region15: #{tpu_custom_call.1} parent=1 // pred_check_branch
      %17 = sbr.rel (0) target = $region17
    $region16: #{tpu_custom_call.1} parent=1 // pred_region
      _
    $region17: #{tpu_custom_call.1} parent=1 // pred_fallthru
      _
    %v18 = vld [vmem:[%s0] sm:$0xff]
    %v19 = vld [vmem:[%s3] sm:$0xff]
    %v20 = vld [vmem:[%s3 + $0x8] sm:$0xff]
    %v21 = vld [vmem:[%s3 + $0x10] sm:$0xff]
    %v22 = vld [vmem:[%s3 + $0x18] sm:$0xff]
    %v23 = vld [vmem:[%s3] sm:$0x1]
    %v24 = vld [vmem:[%s3 + $0x1] sm:$0x1]
    %v25 = vld [vmem:[%s1] sm:$0xff]
    %v26 = vld [vmem:[%s1 + $0x8] sm:$0xff]
    %v27 = vld [vmem:[%s1 + $0x10] sm:$0xff]
    %v28 = vld [vmem:[%s1 + $0x18] sm:$0xff]
    %30 = vset.pattern.permute.xlu0 0
    %31 = vperm.xlu0 %30, %v19
    %v32 = vpop.permute.xlu0 %31
    %35 = vset.pattern.permute.xlu0 0
    %36 = vperm.xlu0 %35, %v20
    %v37 = vpop.permute.xlu0 %36
    %40 = vset.pattern.permute.xlu0 0
    %41 = vperm.xlu0 %40, %v21
    %v42 = vpop.permute.xlu0 %41
    %45 = vset.pattern.permute.xlu0 0
    %46 = vperm.xlu0 %45, %v22
    %v47 = vpop.permute.xlu0 %46
    %vm49 = vcmask 64512
    %v51 = vsel %vm49, %v25, 0
    %v54 = vsel %vm49, %v26, 0
    %v57 = vsel %vm49, %v27, 0
    %v60 = vsel %vm49, %v28, 0
    %62 = vmatpush.msra.mxu0 0.0
    %63 = vmatpush.msra.mxu0 0.0
    %64 = vmatpush.msra.mxu0 0.0
    %65 = vmatpush.msra.mxu0 0.0
    %66 = vmatpush.msra.mxu0 0.0
    %67 = vmatpush.msra.mxu0 0.0
    %68 = vmatpush.msra.mxu0 0.0
    %69 = vmatpush.msra.mxu0 0.0
    %70 = vmatpush.msra.mxu0 0.0
    %71 = vmatpush.msra.mxu0 0.0
    %72 = vmatpush.msra.mxu0 0.0
    %73 = vmatpush.msra.mxu0 0.0
    %74 = vmatpush.msra.mxu0 0.0
    %75 = vmatpush.msra.mxu0 0.0
    %76 = vmatpush.msra.mxu0 0.0
    %77 = vmatpush.msra.mxu0 %v18
    %78 = vmatmul.f32.gmra.mxu0 %v51
    %v79 = vpop.f32.mrf.mxu0
    %v80 = vadd.f32 %v32, %v79
    %81 = vmatmul.f32.gmra.mxu0 %v54
    %v82 = vpop.f32.mrf.mxu0
    %v83 = vadd.f32 %v37, %v82
    %84 = vmatmul.f32.gmra.mxu0 %v57
    %v85 = vpop.f32.mrf.mxu0
    %v86 = vadd.f32 %v42, %v85
    %87 = vmatmul.f32.gmra.mxu0 %v60
    %v88 = vpop.f32.mrf.mxu0
    %v89 = vadd.f32 %v47, %v88
    %90 = vdwg.mxu0
    %v91 = vmax.f32 %v80, 0.0
    %v92 = vmax.f32 %v83, 0.0
    %v93 = vmax.f32 %v86, 0.0
    %v94 = vmax.f32 %v89, 0.0
    %v95 = vld [vmem:[%s2] sm:$0xff]
    %v96 = vld [vmem:[%s2 + $0x8] sm:$0xff]
    %97 = vset.pattern.permute.xlu0 1
    %98 = vperm.xlu0 %97, %v19
    %v99 = vpop.permute.xlu0 %98
    %101 = vset.pattern.permute.xlu0 1
    %102 = vperm.xlu0 %101, %v20
    %v103 = vpop.permute.xlu0 %102
    %vm105 = vcmask 261120
    %v107 = vsel %vm105, %v95, 0
    %v110 = vsel %vm105, %v96, 0
    %112 = vmatpush.msra.mxu0 0.0
    %113 = vmatpush.msra.mxu0 0.0
    %114 = vmatpush.msra.mxu0 0.0
    %115 = vmatpush.msra.mxu0 0.0
    %116 = vmatpush.msra.mxu0 0.0
    %117 = vmatpush.msra.mxu0 0.0
    %118 = vmatpush.msra.mxu0 0.0
    %119 = vmatpush.msra.mxu0 0.0
    %120 = vmatpush.msra.mxu0 0.0
    %121 = vmatpush.msra.mxu0 0.0
    %122 = vmatpush.msra.mxu0 0.0
    %123 = vmatpush.msra.mxu0 0.0
    %124 = vmatpush.msra.mxu0 %v94
    %125 = vmatpush.msra.mxu0 %v93
    %126 = vmatpush.msra.mxu0 %v92
    %127 = vmatpush.msra.mxu0 %v91
    %128 = vmatmul.f32.gmra.mxu0 %v107
    %v129 = vpop.f32.mrf.mxu0
    %v130 = vadd.f32 %v99, %v129
    %131 = vmatmul.f32.gmra.mxu0 %v110
    %v132 = vpop.f32.mrf.mxu0
    %v133 = vadd.f32 %v103, %v132
    %134 = vdwg.mxu0
    %v135 = vmax.f32 %v130, 0.0
    %v136 = vmax.f32 %v133, 0.0
    %137 = vset.pattern.permute.xlu0 2
    %138 = vperm.xlu0 %137, %v19
    %v139 = vpop.permute.xlu0 %138
    %141 = vset.pattern.permute.xlu0 2
    %142 = vperm.xlu0 %141, %v20
    %v143 = vpop.permute.xlu0 %142
    %v145 = vmul.f32 %v135, %v139
    %v146 = vmul.f32 %v136, %v143
    %v147 = vadd.f32 %v145, %v146
    %v148 = vrot.slane %v147, 4
    %v149 = vadd.f32 %v147, %v148
    %v150 = vrot.slane %v149, 2
    %v151 = vadd.f32 %v149, %v150
    %v152 = vrot.slane %v151, 1
    %v153 = vadd.f32 %v151, %v152
    %155 = vset.pattern.permute.xlu0 6
    %156 = vperm.xlu0 %155, %v23
    %v157 = vpop.permute.xlu0 %156
    %v159 = vadd.f32 %v153, %v157
    %160 = vset.pattern.permute.xlu0 3
    %161 = vperm.xlu0 %160, %v19
    %v162 = vpop.permute.xlu0 %161
    %164 = vset.pattern.permute.xlu0 3
    %165 = vperm.xlu0 %164, %v20
    %v166 = vpop.permute.xlu0 %165
    %168 = vset.pattern.permute.xlu0 3
    %169 = vperm.xlu0 %168, %v21
    %v170 = vpop.permute.xlu0 %169
    %172 = vset.pattern.permute.xlu0 3
    %173 = vperm.xlu0 %172, %v22
    %v174 = vpop.permute.xlu0 %173
    %v176 = vmul.f32 %v18, %v162
    %v177 = vmul.f32 %v18, %v166
    %v178 = vmul.f32 %v18, %v170
    %v179 = vmul.f32 %v18, %v174
    %180 = vset.pattern.permute.xlu0 4
    %181 = vperm.xlu0 %180, %v19
    %v182 = vpop.permute.xlu0 %181
    %184 = vset.pattern.permute.xlu0 4
    %185 = vperm.xlu0 %184, %v20
    %v186 = vpop.permute.xlu0 %185
    %188 = vset.pattern.permute.xlu0 4
    %189 = vperm.xlu0 %188, %v21
    %v190 = vpop.permute.xlu0 %189
    %192 = vset.pattern.permute.xlu0 4
    %193 = vperm.xlu0 %192, %v22
    %v194 = vpop.permute.xlu0 %193
    %v196 = vadd.f32 %v176, %v182
    %v197 = vadd.f32 %v177, %v186
    %v198 = vadd.f32 %v178, %v190
    %v199 = vadd.f32 %v179, %v194
    %v200 = vmax.f32 %v196, 0.0
    %v201 = vmax.f32 %v197, 0.0
    %v202 = vmax.f32 %v198, 0.0
    %v203 = vmax.f32 %v199, 0.0
    %v204 = vand.u32 2147483647, %v196
    %v205 = vand.u32 2147483647, %v197
    %v206 = vand.u32 2147483647, %v198
    %v207 = vand.u32 2147483647, %v199
    %v208 = vsub.f32 0.0, %v204
    %v209 = vsub.f32 0.0, %v205
    %v210 = vsub.f32 0.0, %v206
    %v211 = vsub.f32 0.0, %v207
    %v212 = vmul.f32 %v208, 1.442695
    %v213 = vpow.pop %v212
    %v214 = vmul.f32 %v209, 1.442695
    %v215 = vpow.pop %v214
    %v216 = vmul.f32 %v210, 1.442695
    %v217 = vpow.pop %v216
    %v218 = vmul.f32 %v211, 1.442695
    %v219 = vpow.pop %v218
    %v220 = vadd.f32 %v213, 1.0
    %v221 = vlog2.pop %v220
    %v222 = vmul.f32 %v221, 0.6931472
    %v223 = vmul.f32 -0.5, %v213
    %v224 = vadd.f32 %v223, 1.0
    %v225 = vmul.f32 %v224, %v213
    %v226 = vand.u32 2147483647, %v213
    %vm227 = vcmp.lt.f32.partialorder %v226, 0.0004427343
    %v228 = vsel %vm227, %v225, %v222
    %v229 = vadd.f32 %v215, 1.0
    %v230 = vlog2.pop %v229
    %v231 = vmul.f32 %v230, 0.6931472
    %v232 = vmul.f32 -0.5, %v215
    %v233 = vadd.f32 %v232, 1.0
    %v234 = vmul.f32 %v233, %v215
    %v235 = vand.u32 2147483647, %v215
    %vm236 = vcmp.lt.f32.partialorder %v235, 0.0004427343
    %v237 = vsel %vm236, %v234, %v231
    %v238 = vadd.f32 %v217, 1.0
    %v239 = vlog2.pop %v238
    %v240 = vmul.f32 %v239, 0.6931472
    %v241 = vmul.f32 -0.5, %v217
    %v242 = vadd.f32 %v241, 1.0
    %v243 = vmul.f32 %v242, %v217
    %v244 = vand.u32 2147483647, %v217
    %vm245 = vcmp.lt.f32.partialorder %v244, 0.0004427343
    %v246 = vsel %vm245, %v243, %v240
    %v247 = vadd.f32 %v219, 1.0
    %v248 = vlog2.pop %v247
    %v249 = vmul.f32 %v248, 0.6931472
    %v250 = vmul.f32 -0.5, %v219
    %v251 = vadd.f32 %v250, 1.0
    %v252 = vmul.f32 %v251, %v219
    %v253 = vand.u32 2147483647, %v219
    %vm254 = vcmp.lt.f32.partialorder %v253, 0.0004427343
    %v255 = vsel %vm254, %v252, %v249
    %v256 = vadd.f32 %v200, %v228
    %v257 = vadd.f32 %v201, %v237
    %v258 = vadd.f32 %v202, %v246
    %v259 = vadd.f32 %v203, %v255
    %260 = vset.pattern.permute.xlu0 5
    %261 = vperm.xlu0 %260, %v19
    %v262 = vpop.permute.xlu0 %261
    %264 = vset.pattern.permute.xlu0 5
    %265 = vperm.xlu0 %264, %v20
    %v266 = vpop.permute.xlu0 %265
    %268 = vset.pattern.permute.xlu0 5
    %269 = vperm.xlu0 %268, %v21
    %v270 = vpop.permute.xlu0 %269
    %272 = vset.pattern.permute.xlu0 5
    %273 = vperm.xlu0 %272, %v22
    %v274 = vpop.permute.xlu0 %273
    %v276 = vmul.f32 %v256, %v262
    %v277 = vmul.f32 %v257, %v266
    %v278 = vmul.f32 %v258, %v270
    %v279 = vmul.f32 %v259, %v274
    %v280 = vadd.f32 %v276, %v277
    %v281 = vadd.f32 %v280, %v278
    %v282 = vadd.f32 %v281, %v279
    %v283 = vrot.slane %v282, 4
    %v284 = vadd.f32 %v282, %v283
    %v285 = vrot.slane %v284, 2
    %v286 = vadd.f32 %v284, %v285
    %v287 = vrot.slane %v286, 1
    %v288 = vadd.f32 %v286, %v287
    %290 = vset.pattern.permute.xlu0 6
    %291 = vperm.xlu0 %290, %v24
    %v292 = vpop.permute.xlu0 %291
    %v294 = vadd.f32 %v288, %v292
    %v296 = vrot.slane %v294, 7
    %vm298 = vcmask 1040384
    %v299 = vsel %vm298, %v159, %v296
    %300 = vst [vmem:[#allocation2] sm:$0x3] %v299
    // Predicated region
    $region18: #{tpu_custom_call.1} parent=1 // pred_check
      _
    $region19: #{tpu_custom_call.1} parent=1 // pred_check_branch
      %302 = sbr.rel (0) target = $region21
    $region20: #{tpu_custom_call.1} parent=1 // pred_region
      %304 = vsyncadd [#allocation3], 0
      %s306 = sshll.u32 [#allocation2], 4
      %s307 = int_to_ptr.vmem [resolvable:$true] %s306
      %s308 = sshll.u32 %s4, 4
      %s309 = int_to_ptr.hbm [resolvable:$true] %s308
      %311 = dma.vmem_to_hbm [thread:$0]  %s307, 32, %s309, [#allocation3]
    $region21: #{tpu_custom_call.1} parent=1 // pred_fallthru
      _
    // Predicated region
    $region22: #{tpu_custom_call.1} parent=1 // pred_check
      _
    $region23: #{tpu_custom_call.1} parent=1 // pred_check_branch
      %313 = sbr.rel (0) target = $region25
    $region24: #{tpu_custom_call.1} parent=1 // pred_region
      %315 = dma.done [#allocation3], 32
    $region25: #{tpu_custom_call.1} parent=1 // pred_fallthru
      _
    %316 = vsyncpa [#allocation3], 1

</llo_original>
